<compile_context>
chip_gen: v5e
topology: v5e:2x2
jax: 0.10.0
libtpu: 0.0.40
codegen_flags: <defaults>
</compile_context>

<pallas_src>
import jax
import jax.numpy as jnp
from jax.experimental import pallas as pl
from jax.experimental.pallas import tpu as pltpu

B, D0, D1, H, L = 8, 16, 32, 32, 32        # batch, modality dims, hidden, latent
COEFFS = (1.0, 0.5)                        # AdditiveICK coeffs
WEIGHTED = (False, True)                   # AdditiveICK weighted flags (comp 1 weighted)
assert H == L, "bias slab packing ([2, 4H] with 4H == 4L) relies on H == L"

DIN = D0 + D1                              # modalities concatenated wrapper-side
DIN_PAD = 8 * ((DIN + 7) // 8)             # keep packed W1 slab sublane-aligned
NH = 4 * H                                 # merged hidden width  (2 comps x 2 modalities)
NL = 4 * L                                 # merged latent width


# ----------------------------- fused Pallas kernel -----------------------------
def additive_ick_kernel(x_ref, w1_ref, w2_ref, b_ref, out_ref):
    # x_ref : [bt, DIN_PAD]   concatenated modalities [x0 | x1 | 0-pad]
    # w1_ref: [DIN_PAD, 4H]   block-diag layer-1: mod0 -> lanes 0:2H, mod1 -> 2H:4H
    # w2_ref: [4H, 4L]        block-diag layer-2; coeffs / comp-1 latent weights /
    #                         0.5 reduce-compensation folded into modality-1 blocks
    # b_ref : [2, 4H]         row 0 = layer-1 bias, row 1 = layer-2 bias (pre-scaled)
    # out_ref: [1, bt]        lane-dense per-row results
    x = x_ref[...]

    h = jnp.maximum(
        jnp.dot(x, w1_ref[...], preferred_element_type=jnp.float32) + b_ref[0:1, :],
        0.0)                                            # [bt, 4H] = [h00|h10|h01|h11]
    f = jnp.dot(h, w2_ref[...], preferred_element_type=jnp.float32) + b_ref[1:2, :]
    # f = [f00 | f10 | s0*f01 | s1*f11]; swapping halves (XLU lane rotate, near-free
    # next to MXU/VPU work) and multiplying gives every f_a*f_b product twice; the
    # 0.5 folded into s0/s1 compensates for summing all 4L lanes.
    prod = f * pltpu.roll(f, shift=2 * L, axis=1)       # [bt, 4L]
    # Lane-dense store: transpose (XLU vxpose) then reduce over sublanes -> [1, bt].
    out_ref[...] = jnp.sum(jnp.transpose(prod), axis=0, keepdims=True)


def additive_ick(x0, x1, packed):
    """packed: (w1_big [DIN_PAD,4H], w2_big [4H,4L], bias_all [2,4H])."""
    w1_big, w2_big, bias_all = packed
    bsz = x0.shape[0]

    # Tile / grid policy (perf review):
    #   * large batch tile (<= 1024 rows) amortizes the ~0.35us per-grid-step overhead
    #   * bt multiple of 128 keeps the (1, bsz_pad) output blocks lane-dense, unmasked
    #   * >= 2 grid steps so dimension_semantics=("parallel",) can shard the batch
    #     across both v7x TensorCores (the extra tiny step is noise on v5e/v6e)
    BT_MAX = 1024
    bt = max(128, min(BT_MAX, 128 * pl.cdiv(pl.cdiv(bsz, 2), 128)))
    grid_n = max(2, pl.cdiv(bsz, bt))
    bsz_pad = grid_n * bt

    x = jnp.concatenate([x0, x1], axis=1)                        # [bsz, DIN]
    x = jnp.pad(x, ((0, bsz_pad - bsz), (0, DIN_PAD - DIN)))     # zero rows discarded later

    out = pl.pallas_call(
        additive_ick_kernel,
        out_shape=jax.ShapeDtypeStruct((1, bsz_pad), jnp.float32),
        grid_spec=pltpu.PrefetchScalarGridSpec(
            num_scalar_prefetch=0,
            grid=(grid_n,),
            in_specs=[
                pl.BlockSpec((bt, DIN_PAD), lambda i: (i, 0)),
                pl.BlockSpec((DIN_PAD, NH), lambda i: (0, 0)),   # replicated weight slabs
                pl.BlockSpec((NH, NL), lambda i: (0, 0)),
                pl.BlockSpec((2, NH), lambda i: (0, 0)),
            ],
            out_specs=pl.BlockSpec((1, bt), lambda i: (0, i)),
        ),
        compiler_params=pltpu.CompilerParams(
            dimension_semantics=("parallel",)),                  # v7x: shard batch over cores
    )(x, w1_big, w2_big, bias_all)
    return out[0, :bsz]                                          # -> [B], matching torch.sum(dim=1)


# ------------------------- parameter packing (done once) ------------------------
def pack_params(params):
    """Fold the 17 raw tensors into 3 slabs; fold coeffs / comp1_w / 0.5 into layer 2."""
    (c0k0_w1, c0k0_b1, c0k0_w2, c0k0_b2,
     c0k1_w1, c0k1_b1, c0k1_w2, c0k1_b2,
     c1k0_w1, c1k0_b1, c1k0_w2, c1k0_b2,
     c1k1_w1, c1k1_b1, c1k1_w2, c1k1_b2, comp1_w) = params

    # ---- layer 1: block-diagonal over modalities, components side-by-side ----
    w1_m0 = jnp.concatenate([c0k0_w1, c1k0_w1], axis=1)          # [D0, 2H]
    w1_m1 = jnp.concatenate([c0k1_w1, c1k1_w1], axis=1)          # [D1, 2H]
    w1_big = jnp.block([[w1_m0, jnp.zeros((D0, 2 * H), jnp.float32)],
                        [jnp.zeros((D1, 2 * H), jnp.float32), w1_m1]])   # [DIN, 4H]
    w1_big = jnp.pad(w1_big, ((0, DIN_PAD - DIN), (0, 0)))       # sublane-aligned slab
    b1_all = jnp.concatenate([c0k0_b1, c1k0_b1, c0k1_b1, c1k1_b1], axis=1)  # [1, 4H]

    # ---- layer 2: block-diagonal over (component, modality); fold coeffs, the
    # component-1 latent weights, and the 0.5 that compensates the full-width
    # (double-counting) lane reduce into the modality-1 blocks (weights AND bias).
    s0 = jnp.full((1, L), 0.5 * COEFFS[0], jnp.float32)
    s1 = (0.5 * COEFFS[1]) * comp1_w                              # [1, L]
    zHL = jnp.zeros((H, L), jnp.float32)
    w2_big = jnp.block([
        [c0k0_w2, zHL,      zHL,           zHL],
        [zHL,     c1k0_w2,  zHL,           zHL],
        [zHL,     zHL,      c0k1_w2 * s0,  zHL],
        [zHL,     zHL,      zHL,           c1k1_w2 * s1],
    ])                                                            # [4H, 4L]
    b2_all = jnp.concatenate(
        [c0k0_b2, c1k0_b2, c0k1_b2 * s0, c1k1_b2 * s1], axis=1)   # [1, 4L]

    bias_all = jnp.concatenate([b1_all, b2_all], axis=0)          # [2, 4H]
    return w1_big, w2_big, bias_all


# ------------------------- deterministic parameter init -------------------------
def _linear_params(key, fan_in, fan_out):
    kw, kb = jax.random.split(key)
    bound = 1.0 / jnp.sqrt(float(fan_in))       # kaiming-uniform-like bound
    w = jax.random.uniform(kw, (fan_in, fan_out), jnp.float32, -bound, bound)
    b = jax.random.uniform(kb, (1, fan_out), jnp.float32, -bound, bound)
    return w, b


def make_params(key):
    params = []
    # 2 components x 2 modality kernels, each: Linear(D,H), Linear(H,L)
    for comp in range(2):
        for mod, d_in in enumerate((D0, D1)):
            key, k1, k2 = jax.random.split(key, 3)
            w1, b1 = _linear_params(k1, d_in, H)
            w2, b2 = _linear_params(k2, H, L)
            params += [w1, b1, w2, b2]
    # AdditiveICK per-component latent weights (only component 1 is weighted)
    key, kw = jax.random.split(key)
    bound = 1.0 / jnp.sqrt(float(L))
    comp1_w = jax.random.uniform(kw, (1, L), jnp.float32, -bound, bound)
    params.append(comp1_w)
    return tuple(params)


# ----------------------------------- reference -----------------------------------
def _mlp(x, w1, b1, w2, b2):
    h = jnp.maximum(jnp.dot(x, w1, preferred_element_type=jnp.float32) + b1, 0.0)
    return jnp.dot(h, w2, preferred_element_type=jnp.float32) + b2


def reference(x0, x1, params):
    (c0k0_w1, c0k0_b1, c0k0_w2, c0k0_b2,
     c0k1_w1, c0k1_b1, c0k1_w2, c0k1_b2,
     c1k0_w1, c1k0_b1, c1k0_w2, c1k0_b2,
     c1k1_w1, c1k1_b1, c1k1_w2, c1k1_b2, comp1_w) = params
    f00 = _mlp(x0, c0k0_w1, c0k0_b1, c0k0_w2, c0k0_b2)
    f01 = _mlp(x1, c0k1_w1, c0k1_b1, c0k1_w2, c0k1_b2)
    f10 = _mlp(x0, c1k0_w1, c1k0_b1, c1k0_w2, c1k0_b2)
    f11 = _mlp(x1, c1k1_w1, c1k1_b1, c1k1_w2, c1k1_b2)
    y0 = jnp.sum(f00 * f01, axis=1)
    y1 = jnp.sum(f10 * f11 * comp1_w, axis=1)
    return COEFFS[0] * y0 + COEFFS[1] * y1


if __name__ == "__main__":
    key = jax.random.PRNGKey(0)
    kx0, kx1, kp = jax.random.split(key, 3)
    x0 = jax.random.normal(kx0, (B, D0), jnp.float32)
    x1 = jax.random.normal(kx1, (B, D1), jnp.float32)
    params = make_params(kp)

    # Pack once (amortized across calls in a real model).
    packed = jax.tree_util.tree_map(jax.block_until_ready, pack_params(params))

    out = jax.block_until_ready(additive_ick(x0, x1, packed))
    ref = reference(x0, x1, params)
    assert out.shape == (B,)
    assert jnp.allclose(out, ref, atol=1e-4, rtol=1e-4), (out, ref)
    print("KERNEL_OK")
</pallas_src>

<mosaic_0001>
module attributes {stable_mosaic.version = 11 : i64} {
  func.func @additive_ick_kernel(%arg0: i32, %arg1: memref<128x48xf32, #tpu.memory_space<vmem>>, %arg2: memref<48x128xf32, #tpu.memory_space<vmem>>, %arg3: memref<128x128xf32, #tpu.memory_space<vmem>>, %arg4: memref<2x128xf32, #tpu.memory_space<vmem>>, %arg5: memref<1x128xf32, #tpu.memory_space<vmem>>) attributes {dimension_semantics = [#tpu.dimension_semantics<parallel>], iteration_bounds = array<i64: 2>, scalar_prefetch = 0 : i64, scratch_operands = 0 : i64, tpu.core_type = #tpu.core_type<tc>, window_params = [{transform_indices = @transform_0, window_bounds = array<i64: 128, 48>}, {pipeline_mode = #tpu.pipeline_mode<synchronous>, transform_indices = @transform_1, window_bounds = array<i64: 48, 128>}, {pipeline_mode = #tpu.pipeline_mode<synchronous>, transform_indices = @transform_2, window_bounds = array<i64: 128, 128>}, {pipeline_mode = #tpu.pipeline_mode<synchronous>, transform_indices = @transform_3, window_bounds = array<i64: 2, 128>}, {transform_indices = @transform_4, window_bounds = array<i64: 1, 128>}]} {
    %c0 = arith.constant 0 : index
    %c0_0 = arith.constant 0 : index
    %0 = vector.load %arg1[%c0, %c0_0] : memref<128x48xf32, #tpu.memory_space<vmem>>, vector<128x48xf32>
    %c0_1 = arith.constant 0 : index
    %c0_2 = arith.constant 0 : index
    %1 = vector.load %arg2[%c0_1, %c0_2] : memref<48x128xf32, #tpu.memory_space<vmem>>, vector<48x128xf32>
    %cst = arith.constant dense<0.000000e+00> : vector<128x128xf32>
    %2 = tpu.matmul %0, %1, %cst {dimension_numbers = #tpu.dot_dimension_numbers<[1], [0], [0], [1], [0, 0, 1, 1], [], []>} : vector<128x48xf32>, vector<48x128xf32>, vector<128x128xf32> -> vector<128x128xf32>
    %c0_3 = arith.constant 0 : index
    %c0_4 = arith.constant 0 : index
    %3 = vector.load %arg4[%c0_3, %c0_4] : memref<2x128xf32, #tpu.memory_space<vmem>>, vector<1x128xf32>
    %4 = vector.broadcast %3 : vector<1x128xf32> to vector<128x128xf32>
    %5 = arith.addf %2, %4 : vector<128x128xf32>
    %cst_5 = arith.constant 0.000000e+00 : f32
    %6 = vector.broadcast %cst_5 : f32 to vector<128x128xf32>
    %7 = arith.maximumf %5, %6 : vector<128x128xf32>
    %c0_6 = arith.constant 0 : index
    %c0_7 = arith.constant 0 : index
    %8 = vector.load %arg3[%c0_6, %c0_7] : memref<128x128xf32, #tpu.memory_space<vmem>>, vector<128x128xf32>
    %cst_8 = arith.constant dense<0.000000e+00> : vector<128x128xf32>
    %9 = tpu.matmul %7, %8, %cst_8 {dimension_numbers = #tpu.dot_dimension_numbers<[1], [0], [0], [1], [0, 0, 1, 1], [], []>} : vector<128x128xf32>, vector<128x128xf32>, vector<128x128xf32> -> vector<128x128xf32>
    %c1 = arith.constant 1 : index
    %c0_9 = arith.constant 0 : index
    %10 = vector.load %arg4[%c1, %c0_9] : memref<2x128xf32, #tpu.memory_space<vmem>>, vector<1x128xf32>
    %11 = vector.broadcast %10 : vector<1x128xf32> to vector<128x128xf32>
    %12 = arith.addf %9, %11 : vector<128x128xf32>
    %c64_i32 = arith.constant 64 : i32
    %13 = tpu.dynamic_rotate %12 by %c64_i32 dim 1 : vector<128x128xf32>, i32 -> vector<128x128xf32>
    %14 = arith.mulf %12, %13 : vector<128x128xf32>
    %15 = tpu.transpose %14, [1, 0] : vector<128x128xf32> -> vector<128x128xf32>
    %cst_10 = arith.constant dense<0.000000e+00> : vector<128xf32>
    %16 = vector.multi_reduction <add>, %15, %cst_10 [0] : vector<128x128xf32> to vector<128xf32>
    %17 = vector.shape_cast %16 : vector<128xf32> to vector<1x128xf32>
    %c0_11 = arith.constant 0 : index
    %c0_12 = arith.constant 0 : index
    %18 = vector.load %arg5[%c0_11, %c0_12] : memref<1x128xf32, #tpu.memory_space<vmem>>, vector<1x128xf32>
    tpu.vector_store %arg5[%c0_11, %c0_12], %17 {strides = array<i32>} : memref<1x128xf32, #tpu.memory_space<vmem>>, vector<1x128xf32>,
    return
  }
  func.func @transform_0(%arg0: i32) -> (i32, i32) {
    %c0_i32 = arith.constant 0 : i32
    %c0_i32_0 = arith.constant 0 : i32
    return %arg0, %c0_i32 : i32, i32
  }
  func.func @transform_1(%arg0: i32) -> (i32, i32) {
    %c0_i32 = arith.constant 0 : i32
    %c0_i32_0 = arith.constant 0 : i32
    %c0_i32_1 = arith.constant 0 : i32
    return %c0_i32, %c0_i32_0 : i32, i32
  }
  func.func @transform_2(%arg0: i32) -> (i32, i32) {
    %c0_i32 = arith.constant 0 : i32
    %c0_i32_0 = arith.constant 0 : i32
    %c0_i32_1 = arith.constant 0 : i32
    return %c0_i32, %c0_i32_0 : i32, i32
  }
  func.func @transform_3(%arg0: i32) -> (i32, i32) {
    %c0_i32 = arith.constant 0 : i32
    %c0_i32_0 = arith.constant 0 : i32
    %c0_i32_1 = arith.constant 0 : i32
    return %c0_i32, %c0_i32_0 : i32, i32
  }
  func.func @transform_4(%arg0: i32) -> (i32, i32) {
    %c0_i32 = arith.constant 0 : i32
    %c0_i32_0 = arith.constant 0 : i32
    return %c0_i32, %arg0 : i32, i32
  }
}

</mosaic_0001>

<llo_original>
// kernel: tpu_custom_call.1
$region0: #{tpu_custom_call.1}
  #allocation0 [shape = 'u32[]', space=smem, size = 0x4, offset = 0x4, fixed_abs, tag = 'smem constant byte address 0x4 - core index']
  #allocation1 [shape = 'u32[72,128]{1,0:T(1,128)}', space=vmem, size = 0x9000, scoped, tag = 'internal scratch']
  %s0 = inlined_call_operand.vmem [shape: f32[256,48], index: 0, kind: input, shape index: {}]
  %s1 = inlined_call_operand.vmem [shape: f32[48,128], index: 1, kind: input, shape index: {}]
  %s2 = inlined_call_operand.vmem [shape: f32[128,128], index: 2, kind: input, shape index: {}]
  %s3 = inlined_call_operand.vmem [shape: f32[2,128], index: 3, kind: input, shape index: {}]
  %s4 = inlined_call_operand.hbm [shape: f32[1,256], index: 4, kind: output, shape index: {}]
  %s5 = sld [smem:[#allocation0]]
  $region49: #{tpu_custom_call.1} parent=0
    _
  %s7 = ssub.s32 1, %s5
  %s8 = scalar_select 0, %s7, %s5
  $region1: #{tpu_custom_call.1} parent=0
    #allocation2 [shape = 'u8[1024]{0}', space=vmem, size = 0x400, scoped, tag = 'output window, operand 0']
    #allocation3 [shape = 's32[2]{0}', space=sflag, size = 0x8, scoped, tag = 'scoped memory for tpu_custom_call.1']
    %9 = vsyncpa [#allocation3], 0
    %s10 = scalar_lea.sflag [#allocation3], 1
    %11 = vsyncpa %s10, 0
    loop: start=0, step=1, limit=4
    $region2: #{tpu_custom_call.1} parent=1 // loop_pre_header
      _
    $region3: #{tpu_custom_call.1} parent=1 // loop_header
      %s13 = sphi 0, %s17
      %p14 = scmp.ge.s32.totalorder %s13, 4
      %s23 = sphi 0, %s25
      %s26 = sphi 0, %s23
      %s27 = sphi 0, %s26
      %s43 = sphi 0, %s27
      %s47 = sphi 0, %s47
      %s49 = sphi 0, %s47
      %s50 = sphi 0, %s49
      %s64 = sphi 0, %s50
      %s68 = sphi 0, %s68
      %s70 = sphi 0, %s68
      %s71 = sphi 0, %s70
      %s85 = sphi 0, %s71
      %s89 = sphi 0, %s89
      %s91 = sphi 0, %s89
      %s92 = sphi 0, %s91
      %s106 = sphi 0, %s92
      %s112 = sphi 0, %s114
      %s115 = sphi 0, %s112
      %s116 = sphi 0, %s115
      %s132 = sphi 0, %s116
    $region4: #{tpu_custom_call.1} parent=1 // loop_header_branch
      %16 = sbr.rel (%p14) target = $region8
    $region5: #{tpu_custom_call.1} parent=1 // loop_body
      %s18 = ssub.s32 %s13, 1
      %s19 = ssub.s32 %s13, 2
      %s20 = sadd.s32 %s13, 1
      %s21 = ssub.s32 %s13, %s20
      %p22 = scmp.eq.s32.totalorder %s21, 0
      %s24 = sadd.s32 %s23, 1
      %s25 = scalar_select %p22, %s23, %s24
      %p28 = pneg %p22
      %p29 = scmp.eq.s32.totalorder %s13, 1
      %p30 = por %p28, %p29
      %p31 = scmp.ne.s32.totalorder %s23, %s26
      %p32 = scmp.eq.s32.totalorder %s13, 0
      %p33 = por %p31, %p32
      %p34 = scmp.ne.s32.totalorder %s23, %s26
      %p35 = scmp.eq.s32.totalorder %s18, 1
      %p36 = por %p34, %p35
      %p37 = scmp.ne.s32.totalorder %s26, %s27
      %p38 = scmp.eq.s32.totalorder %s18, 0
      %p39 = por %p37, %p38
      %p40 = scmp.ne.s32.totalorder %s26, %s27
      %p41 = scmp.eq.s32.totalorder %s19, 1
      %p42 = por %p40, %p41
      %p44 = scmp.ne.s32.totalorder %s27, %s43
      %p45 = scmp.eq.s32.totalorder %s19, 0
      %p46 = por %p44, %p45
      %s48 = sadd.s32 %s47, 1
      %p51 = scmp.eq.s32.totalorder %s13, 1
      %p52 = scmp.ne.s32.totalorder %s47, %s49
      %p53 = scmp.eq.s32.totalorder %s13, 0
      %p54 = por %p52, %p53
      %p55 = scmp.ne.s32.totalorder %s47, %s49
      %p56 = scmp.eq.s32.totalorder %s18, 1
      %p57 = por %p55, %p56
      %p58 = scmp.ne.s32.totalorder %s49, %s50
      %p59 = scmp.eq.s32.totalorder %s18, 0
      %p60 = por %p58, %p59
      %p61 = scmp.ne.s32.totalorder %s49, %s50
      %p62 = scmp.eq.s32.totalorder %s19, 1
      %p63 = por %p61, %p62
      %p65 = scmp.ne.s32.totalorder %s50, %s64
      %p66 = scmp.eq.s32.totalorder %s19, 0
      %p67 = por %p65, %p66
      %s69 = sadd.s32 %s68, 1
      %p72 = scmp.eq.s32.totalorder %s13, 1
      %p73 = scmp.ne.s32.totalorder %s68, %s70
      %p74 = scmp.eq.s32.totalorder %s13, 0
      %p75 = por %p73, %p74
      %p76 = scmp.ne.s32.totalorder %s68, %s70
      %p77 = scmp.eq.s32.totalorder %s18, 1
      %p78 = por %p76, %p77
      %p79 = scmp.ne.s32.totalorder %s70, %s71
      %p80 = scmp.eq.s32.totalorder %s18, 0
      %p81 = por %p79, %p80
      %p82 = scmp.ne.s32.totalorder %s70, %s71
      %p83 = scmp.eq.s32.totalorder %s19, 1
      %p84 = por %p82, %p83
      %p86 = scmp.ne.s32.totalorder %s71, %s85
      %p87 = scmp.eq.s32.totalorder %s19, 0
      %p88 = por %p86, %p87
      %s90 = sadd.s32 %s89, 1
      %p93 = scmp.eq.s32.totalorder %s13, 1
      %p94 = scmp.ne.s32.totalorder %s89, %s91
      %p95 = scmp.eq.s32.totalorder %s13, 0
      %p96 = por %p94, %p95
      %p97 = scmp.ne.s32.totalorder %s89, %s91
      %p98 = scmp.eq.s32.totalorder %s18, 1
      %p99 = por %p97, %p98
      %p100 = scmp.ne.s32.totalorder %s91, %s92
      %p101 = scmp.eq.s32.totalorder %s18, 0
      %p102 = por %p100, %p101
      %p103 = scmp.ne.s32.totalorder %s91, %s92
      %p104 = scmp.eq.s32.totalorder %s19, 1
      %p105 = por %p103, %p104
      %p107 = scmp.ne.s32.totalorder %s92, %s106
      %p108 = scmp.eq.s32.totalorder %s19, 0
      %p109 = por %p107, %p108
      %s110 = ssub.s32 %s13, %s20
      %p111 = scmp.eq.s32.totalorder %s110, 0
      %s113 = sadd.s32 %s112, 1
      %s114 = scalar_select %p111, %s112, %s113
      %p117 = pneg %p111
      %p118 = scmp.eq.s32.totalorder %s13, 1
      %p119 = por %p117, %p118
      %p120 = scmp.ne.s32.totalorder %s112, %s115
      %p121 = scmp.eq.s32.totalorder %s13, 0
      %p122 = por %p120, %p121
      %p123 = scmp.ne.s32.totalorder %s112, %s115
      %p124 = scmp.eq.s32.totalorder %s18, 1
      %p125 = por %p123, %p124
      %p126 = scmp.ne.s32.totalorder %s115, %s116
      %p127 = scmp.eq.s32.totalorder %s18, 0
      %p128 = por %p126, %p127
      %p129 = scmp.ne.s32.totalorder %s115, %s116
      %p130 = scmp.eq.s32.totalorder %s19, 1
      %p131 = por %p129, %p130
      %p133 = scmp.ne.s32.totalorder %s116, %s132
      %p134 = scmp.eq.s32.totalorder %s19, 0
      %p135 = por %p133, %p134
      %p136 = scmp.le.s32.totalorder 1, %s13
      %p137 = scmp.lt.s32.totalorder %s13, 3
      %p138 = pnand %p136, %p137
      %p139 = pneg %p138
      // Predicated region
      $region9: #{tpu_custom_call.1} parent=5 // pred_check
        _
      $region10: #{tpu_custom_call.1} parent=5 // pred_check_branch
        %141 = sbr.rel (%p138) target = $region12
      $region11: #{tpu_custom_call.1} parent=5 // pred_region
        %s142 = ssub.s32 %s13, 1
        // Predicated region
        $region13: #{tpu_custom_call.1} parent=11 // pred_check
          %p143 = pneg %p60
        $region14: #{tpu_custom_call.1} parent=11 // pred_check_branch
          %145 = sbr.rel (%p143) target = $region16
        $region15: #{tpu_custom_call.1} parent=11 // pred_region
          _
        $region16: #{tpu_custom_call.1} parent=11 // pred_fallthru
          _
        // Predicated region
        $region17: #{tpu_custom_call.1} parent=11 // pred_check
          %p146 = pneg %p81
        $region18: #{tpu_custom_call.1} parent=11 // pred_check_branch
          %148 = sbr.rel (%p146) target = $region20
        $region19: #{tpu_custom_call.1} parent=11 // pred_region
          _
        $region20: #{tpu_custom_call.1} parent=11 // pred_fallthru
          _
        // Predicated region
        $region21: #{tpu_custom_call.1} parent=11 // pred_check
          %p149 = pneg %p102
        $region22: #{tpu_custom_call.1} parent=11 // pred_check_branch
          %151 = sbr.rel (%p149) target = $region24
        $region23: #{tpu_custom_call.1} parent=11 // pred_region
          _
        $region24: #{tpu_custom_call.1} parent=11 // pred_fallthru
          _
      $region12: #{tpu_custom_call.1} parent=5 // pred_fallthru
        _
      %p152 = scmp.lt.s32.totalorder %s13, 2
      // Predicated region
      $region25: #{tpu_custom_call.1} parent=5 // pred_check
        %p153 = pneg %p152
      $region26: #{tpu_custom_call.1} parent=5 // pred_check_branch
        %155 = sbr.rel (%p153) target = $region28
      $region27: #{tpu_custom_call.1} parent=5 // pred_region
        // Predicated region
        $region29: #{tpu_custom_call.1} parent=27 // pred_check
          %p156 = pneg %p33
        $region30: #{tpu_custom_call.1} parent=27 // pred_check_branch
          %158 = sbr.rel (%p156) target = $region32
        $region31: #{tpu_custom_call.1} parent=27 // pred_region
          %s159 = smul.u32 16, %s13
          %p160 = scmp.lt.s32.totalorder %s159, 31
          %s161 = scalar_select %p160, %s159, 31
          %s162 = smul.addr %s161, 8
          %s163 = scalar_lea.vmem %s0, %s162
          %s164 = smul.u32 16, %s13
        $region32: #{tpu_custom_call.1} parent=27 // pred_fallthru
          _
      $region28: #{tpu_custom_call.1} parent=5 // pred_fallthru
        _
      %p165 = scmp.le.s32.totalorder 1, %s13
      %p166 = scmp.lt.s32.totalorder %s13, 3
      %p167 = pnand %p165, %p166
      %p168 = pneg %p167
      // Predicated region
      $region33: #{tpu_custom_call.1} parent=5 // pred_check
        _
      $region34: #{tpu_custom_call.1} parent=5 // pred_check_branch
        %170 = sbr.rel (%p167) target = $region36
      $region35: #{tpu_custom_call.1} parent=5 // pred_region
        %s171 = ssub.s32 %s13, 1
        %s172 = smul.u32 16, %s18
        %p173 = scmp.lt.s32.totalorder %s172, 31
        %s174 = scalar_select %p173, %s172, 31
        %s175 = smul.addr %s174, 8
        %s176 = scalar_lea.vmem %s0, %s175
        %p177 = pneg %p39
        %p178 = pneg %p36
        %p179 = pneg %p60
        %p180 = pneg %p57
        %p181 = pneg %p81
        %p182 = pneg %p78
        %p183 = pneg %p102
        %p184 = pneg %p99
        %p185 = pneg %p128
        %p186 = pneg %p125
        %s187 = sand.u32 %s115, 1
        %s188 = scalar_lea.sflag [#allocation3], %s187
        %s189 = sand.u32 %s115, 1
        %s190 = scalar_lea.vmem [#allocation2], %s189
        %s191 = smul.u32 16, %s18
        %p192 = scmp.lt.s32.totalorder %s191, 31
        %s193 = scalar_select %p192, %s191, 31
        %s194 = smul.addr %s193, 8
        %s195 = scalar_lea.vmem %s0, %s194
        %s196 = smul.u32 16, %s18
        %v197 = vld [vmem:[%s195] sm:$0xff]
        %v198 = vld [vmem:[%s195 + $0x8] sm:$0xff]
        %v199 = vld [vmem:[%s195 + $0x10] sm:$0xff]
        %v200 = vld [vmem:[%s195 + $0x18] sm:$0xff]
        %v201 = vld [vmem:[%s195 + $0x20] sm:$0xff]
        %v202 = vld [vmem:[%s195 + $0x28] sm:$0xff]
        %v203 = vld [vmem:[%s195 + $0x30] sm:$0xff]
        %v204 = vld [vmem:[%s195 + $0x38] sm:$0xff]
        %v205 = vld [vmem:[%s195 + $0x40] sm:$0xff]
        %v206 = vld [vmem:[%s195 + $0x48] sm:$0xff]
        %v207 = vld [vmem:[%s195 + $0x50] sm:$0xff]
        %v208 = vld [vmem:[%s195 + $0x58] sm:$0xff]
        %v209 = vld [vmem:[%s195 + $0x60] sm:$0xff]
        %v210 = vld [vmem:[%s195 + $0x68] sm:$0xff]
        %v211 = vld [vmem:[%s195 + $0x70] sm:$0xff]
        %v212 = vld [vmem:[%s195 + $0x78] sm:$0xff]
        %v213 = vld [vmem:[%s1] sm:$0xff]
        %v214 = vld [vmem:[%s1 + $0x8] sm:$0xff]
        %v215 = vld [vmem:[%s1 + $0x10] sm:$0xff]
        %v216 = vld [vmem:[%s1 + $0x18] sm:$0xff]
        %v217 = vld [vmem:[%s1 + $0x20] sm:$0xff]
        %v218 = vld [vmem:[%s1 + $0x28] sm:$0xff]
        %v219 = vld [vmem:[%s3] sm:$0x1]
        %v220 = vperm.slane %v219, 0
        %vm221 = vcmask 392192
        %v223 = vsel %vm221, %v197, 0
        %v226 = vsel %vm221, %v198, 0
        %v229 = vsel %vm221, %v199, 0
        %v232 = vsel %vm221, %v200, 0
        %v235 = vsel %vm221, %v201, 0
        %v238 = vsel %vm221, %v202, 0
        %v241 = vsel %vm221, %v203, 0
        %v244 = vsel %vm221, %v204, 0
        %v247 = vsel %vm221, %v205, 0
        %v250 = vsel %vm221, %v206, 0
        %v253 = vsel %vm221, %v207, 0
        %v256 = vsel %vm221, %v208, 0
        %v259 = vsel %vm221, %v209, 0
        %v262 = vsel %vm221, %v210, 0
        %v265 = vsel %vm221, %v211, 0
        %v268 = vsel %vm221, %v212, 0
        %270 = vmatpush.msra.mxu0 0.0
        %271 = vmatpush.msra.mxu0 0.0
        %272 = vmatpush.msra.mxu0 0.0
        %273 = vmatpush.msra.mxu0 0.0
        %274 = vmatpush.msra.mxu0 0.0
        %275 = vmatpush.msra.mxu0 0.0
        %276 = vmatpush.msra.mxu0 0.0
        %277 = vmatpush.msra.mxu0 0.0
        %278 = vmatpush.msra.mxu0 0.0
        %279 = vmatpush.msra.mxu0 0.0
        %280 = vmatpush.msra.mxu0 %v218
        %281 = vmatpush.msra.mxu0 %v217
        %282 = vmatpush.msra.mxu0 %v216
        %283 = vmatpush.msra.mxu0 %v215
        %284 = vmatpush.msra.mxu0 %v214
        %285 = vmatpush.msra.mxu0 %v213
        %286 = vmatmul.f32.gmra.mxu0 %v223
        %v287 = vpop.f32.mrf.mxu0
        %v288 = vadd.f32 %v220, %v287
        %289 = vmatmul.f32.gmra.mxu0 %v226
        %v290 = vpop.f32.mrf.mxu0
        %v291 = vadd.f32 %v220, %v290
        %292 = vmatmul.f32.gmra.mxu0 %v229
        %v293 = vpop.f32.mrf.mxu0
        %v294 = vadd.f32 %v220, %v293
        %295 = vmatmul.f32.gmra.mxu0 %v232
        %v296 = vpop.f32.mrf.mxu0
        %v297 = vadd.f32 %v220, %v296
        %298 = vmatmul.f32.gmra.mxu0 %v235
        %v299 = vpop.f32.mrf.mxu0
        %v300 = vadd.f32 %v220, %v299
        %301 = vmatmul.f32.gmra.mxu0 %v238
        %v302 = vpop.f32.mrf.mxu0
        %v303 = vadd.f32 %v220, %v302
        %304 = vmatmul.f32.gmra.mxu0 %v241
        %v305 = vpop.f32.mrf.mxu0
        %v306 = vadd.f32 %v220, %v305
        %307 = vmatmul.f32.gmra.mxu0 %v244
        %v308 = vpop.f32.mrf.mxu0
        %v309 = vadd.f32 %v220, %v308
        %310 = vmatmul.f32.gmra.mxu0 %v247
        %v311 = vpop.f32.mrf.mxu0
        %v312 = vadd.f32 %v220, %v311
        %313 = vmatmul.f32.gmra.mxu0 %v250
        %v314 = vpop.f32.mrf.mxu0
        %v315 = vadd.f32 %v220, %v314
        %316 = vmatmul.f32.gmra.mxu0 %v253
        %v317 = vpop.f32.mrf.mxu0
        %v318 = vadd.f32 %v220, %v317
        %319 = vmatmul.f32.gmra.mxu0 %v256
        %v320 = vpop.f32.mrf.mxu0
        %v321 = vadd.f32 %v220, %v320
        %322 = vmatmul.f32.gmra.mxu0 %v259
        %v323 = vpop.f32.mrf.mxu0
        %v324 = vadd.f32 %v220, %v323
        %325 = vmatmul.f32.gmra.mxu0 %v262
        %v326 = vpop.f32.mrf.mxu0
        %v327 = vadd.f32 %v220, %v326
        %328 = vmatmul.f32.gmra.mxu0 %v265
        %v329 = vpop.f32.mrf.mxu0
        %v330 = vadd.f32 %v220, %v329
        %331 = vmatmul.f32.gmra.mxu0 %v268
        %v332 = vpop.f32.mrf.mxu0
        %v333 = vadd.f32 %v220, %v332
        %334 = vdwg.mxu0
        %v335 = vmax.f32 %v288, 0.0
        %v336 = vmax.f32 %v291, 0.0
        %v337 = vmax.f32 %v294, 0.0
        %v338 = vmax.f32 %v297, 0.0
        %v339 = vmax.f32 %v300, 0.0
        %v340 = vmax.f32 %v303, 0.0
        %v341 = vmax.f32 %v306, 0.0
        %v342 = vmax.f32 %v309, 0.0
        %v343 = vmax.f32 %v312, 0.0
        %v344 = vmax.f32 %v315, 0.0
        %v345 = vmax.f32 %v318, 0.0
        %v346 = vmax.f32 %v321, 0.0
        %v347 = vmax.f32 %v324, 0.0
        %v348 = vmax.f32 %v327, 0.0
        %v349 = vmax.f32 %v330, 0.0
        %v350 = vmax.f32 %v333, 0.0
        %v351 = vld [vmem:[%s2] sm:$0xff]
        %v352 = vld [vmem:[%s2 + $0x8] sm:$0xff]
        %v353 = vld [vmem:[%s2 + $0x10] sm:$0xff]
        %v354 = vld [vmem:[%s2 + $0x18] sm:$0xff]
        %v355 = vld [vmem:[%s2 + $0x20] sm:$0xff]
        %v356 = vld [vmem:[%s2 + $0x28] sm:$0xff]
        %v357 = vld [vmem:[%s2 + $0x30] sm:$0xff]
        %v358 = vld [vmem:[%s2 + $0x38] sm:$0xff]
        %v359 = vld [vmem:[%s2 + $0x40] sm:$0xff]
        %v360 = vld [vmem:[%s2 + $0x48] sm:$0xff]
        %v361 = vld [vmem:[%s2 + $0x50] sm:$0xff]
        %v362 = vld [vmem:[%s2 + $0x58] sm:$0xff]
        %v363 = vld [vmem:[%s2 + $0x60] sm:$0xff]
        %v364 = vld [vmem:[%s2 + $0x68] sm:$0xff]
        %v365 = vld [vmem:[%s2 + $0x70] sm:$0xff]
        %v366 = vld [vmem:[%s2 + $0x78] sm:$0xff]
        %v367 = vld [vmem:[%s3 + $0x1] sm:$0x1]
        %v368 = vperm.slane %v367, 0
        %369 = vmatpush.msra.mxu0 %v366
        %370 = vmatpush.msra.mxu0 %v365
        %371 = vmatpush.msra.mxu0 %v364
        %372 = vmatpush.msra.mxu0 %v363
        %373 = vmatpush.msra.mxu0 %v362
        %374 = vmatpush.msra.mxu0 %v361
        %375 = vmatpush.msra.mxu0 %v360
        %376 = vmatpush.msra.mxu0 %v359
        %377 = vmatpush.msra.mxu0 %v358
        %378 = vmatpush.msra.mxu0 %v357
        %379 = vmatpush.msra.mxu0 %v356
        %380 = vmatpush.msra.mxu0 %v355
        %381 = vmatpush.msra.mxu0 %v354
        %382 = vmatpush.msra.mxu0 %v353
        %383 = vmatpush.msra.mxu0 %v352
        %384 = vmatpush.msra.mxu0 %v351
        %385 = vmatmul.f32.gmra.mxu0 %v335
        %v386 = vpop.f32.mrf.mxu0
        %v387 = vadd.f32 %v368, %v386
        %388 = vmatmul.f32.gmra.mxu0 %v336
        %v389 = vpop.f32.mrf.mxu0
        %v390 = vadd.f32 %v368, %v389
        %391 = vmatmul.f32.gmra.mxu0 %v337
        %v392 = vpop.f32.mrf.mxu0
        %v393 = vadd.f32 %v368, %v392
        %394 = vmatmul.f32.gmra.mxu0 %v338
        %v395 = vpop.f32.mrf.mxu0
        %v396 = vadd.f32 %v368, %v395
        %397 = vmatmul.f32.gmra.mxu0 %v339
        %v398 = vpop.f32.mrf.mxu0
        %v399 = vadd.f32 %v368, %v398
        %400 = vmatmul.f32.gmra.mxu0 %v340
        %v401 = vpop.f32.mrf.mxu0
        %v402 = vadd.f32 %v368, %v401
        %403 = vmatmul.f32.gmra.mxu0 %v341
        %v404 = vpop.f32.mrf.mxu0
        %v405 = vadd.f32 %v368, %v404
        %406 = vmatmul.f32.gmra.mxu0 %v342
        %v407 = vpop.f32.mrf.mxu0
        %v408 = vadd.f32 %v368, %v407
        %409 = vmatmul.f32.gmra.mxu0 %v343
        %v410 = vpop.f32.mrf.mxu0
        %v411 = vadd.f32 %v368, %v410
        %412 = vmatmul.f32.gmra.mxu0 %v344
        %v413 = vpop.f32.mrf.mxu0
        %v414 = vadd.f32 %v368, %v413
        %415 = vmatmul.f32.gmra.mxu0 %v345
        %v416 = vpop.f32.mrf.mxu0
        %v417 = vadd.f32 %v368, %v416
        %418 = vmatmul.f32.gmra.mxu0 %v346
        %v419 = vpop.f32.mrf.mxu0
        %v420 = vadd.f32 %v368, %v419
        %421 = vmatmul.f32.gmra.mxu0 %v347
        %v422 = vpop.f32.mrf.mxu0
        %v423 = vadd.f32 %v368, %v422
        %424 = vmatmul.f32.gmra.mxu0 %v348
        %v425 = vpop.f32.mrf.mxu0
        %v426 = vadd.f32 %v368, %v425
        %427 = vmatmul.f32.gmra.mxu0 %v349
        %v428 = vpop.f32.mrf.mxu0
        %v429 = vadd.f32 %v368, %v428
        %430 = vmatmul.f32.gmra.mxu0 %v350
        %v431 = vpop.f32.mrf.mxu0
        %v432 = vadd.f32 %v368, %v431
        %433 = vdwg.mxu0
        %434 = vrot.lane.b32.xlu0 %v387, 64
        %v435 = vpop.permute.xlu0 %434
        %436 = vrot.lane.b32.xlu0 %v390, 64
        %v437 = vpop.permute.xlu0 %436
        %438 = vrot.lane.b32.xlu0 %v393, 64
        %v439 = vpop.permute.xlu0 %438
        %440 = vrot.lane.b32.xlu0 %v396, 64
        %v441 = vpop.permute.xlu0 %440
        %442 = vrot.lane.b32.xlu0 %v399, 64
        %v443 = vpop.permute.xlu0 %442
        %444 = vrot.lane.b32.xlu0 %v402, 64
        %v445 = vpop.permute.xlu0 %444
        %446 = vrot.lane.b32.xlu0 %v405, 64
        %v447 = vpop.permute.xlu0 %446
        %448 = vrot.lane.b32.xlu0 %v408, 64
        %v449 = vpop.permute.xlu0 %448
        %450 = vrot.lane.b32.xlu0 %v411, 64
        %v451 = vpop.permute.xlu0 %450
        %452 = vrot.lane.b32.xlu0 %v414, 64
        %v453 = vpop.permute.xlu0 %452
        %454 = vrot.lane.b32.xlu0 %v417, 64
        %v455 = vpop.permute.xlu0 %454
        %456 = vrot.lane.b32.xlu0 %v420, 64
        %v457 = vpop.permute.xlu0 %456
        %458 = vrot.lane.b32.xlu0 %v423, 64
        %v459 = vpop.permute.xlu0 %458
        %460 = vrot.lane.b32.xlu0 %v426, 64
        %v461 = vpop.permute.xlu0 %460
        %462 = vrot.lane.b32.xlu0 %v429, 64
        %v463 = vpop.permute.xlu0 %462
        %464 = vrot.lane.b32.xlu0 %v432, 64
        %v465 = vpop.permute.xlu0 %464
        %v466 = vmul.f32 %v387, %v435
        %v467 = vmul.f32 %v390, %v437
        %v468 = vmul.f32 %v393, %v439
        %v469 = vmul.f32 %v396, %v441
        %v470 = vmul.f32 %v399, %v443
        %v471 = vmul.f32 %v402, %v445
        %v472 = vmul.f32 %v405, %v447
        %v473 = vmul.f32 %v408, %v449
        %v474 = vmul.f32 %v411, %v451
        %v475 = vmul.f32 %v414, %v453
        %v476 = vmul.f32 %v417, %v455
        %v477 = vmul.f32 %v420, %v457
        %v478 = vmul.f32 %v423, %v459
        %v479 = vmul.f32 %v426, %v461
        %v480 = vmul.f32 %v429, %v463
        %v481 = vmul.f32 %v432, %v465
        %482 = vxpose.xlu0.b32.start [1/16] %v466, 128
        %483 = vxpose.xlu0.b32.cont [2/16] %v467, 128
        %484 = vxpose.xlu0.b32.cont [3/16] %v468, 128
        %485 = vxpose.xlu0.b32.cont [4/16] %v469, 128
        %486 = vxpose.xlu0.b32.cont [5/16] %v470, 128
        %487 = vxpose.xlu0.b32.cont [6/16] %v471, 128
        %488 = vxpose.xlu0.b32.cont [7/16] %v472, 128
        %489 = vxpose.xlu0.b32.cont [8/16] %v473, 128
        %490 = vxpose.xlu0.b32.cont [9/16] %v474, 128
        %491 = vxpose.xlu0.b32.cont [10/16] %v475, 128
        %492 = vxpose.xlu0.b32.cont [11/16] %v476, 128
        %493 = vxpose.xlu0.b32.cont [12/16] %v477, 128
        %494 = vxpose.xlu0.b32.cont [13/16] %v478, 128
        %495 = vxpose.xlu0.b32.cont [14/16] %v479, 128
        %496 = vxpose.xlu0.b32.cont [15/16] %v480, 128
        %497 = vxpose.xlu0.b32.end [16/16] %v481, 128
        %v498 = vpop.trf.xlu0
        %v499 = vpop.trf.xlu0
        %v500 = vpop.trf.xlu0
        %v501 = vpop.trf.xlu0
        %v502 = vpop.trf.xlu0
        %v503 = vpop.trf.xlu0
        %v504 = vpop.trf.xlu0
        %v505 = vpop.trf.xlu0
        %v506 = vpop.trf.xlu0
        %v507 = vpop.trf.xlu0
        %v508 = vpop.trf.xlu0
        %v509 = vpop.trf.xlu0
        %v510 = vpop.trf.xlu0
        %v511 = vpop.trf.xlu0
        %v512 = vpop.trf.xlu0
        %v513 = vpop.trf.xlu0
        %v514 = vadd.f32 %v498, %v499
        %v515 = vadd.f32 %v514, %v500
        %v516 = vadd.f32 %v515, %v501
        %v517 = vadd.f32 %v516, %v502
        %v518 = vadd.f32 %v517, %v503
        %v519 = vadd.f32 %v518, %v504
        %v520 = vadd.f32 %v519, %v505
        %v521 = vadd.f32 %v520, %v506
        %v522 = vadd.f32 %v521, %v507
        %v523 = vadd.f32 %v522, %v508
        %v524 = vadd.f32 %v523, %v509
        %v525 = vadd.f32 %v524, %v510
        %v526 = vadd.f32 %v525, %v511
        %v527 = vadd.f32 %v526, %v512
        %v528 = vadd.f32 %v527, %v513
        %v529 = vrot.slane %v528, 4
        %v530 = vadd.f32 %v528, %v529
        %v531 = vrot.slane %v530, 2
        %v532 = vadd.f32 %v530, %v531
        %v533 = vrot.slane %v532, 1
        %v534 = vadd.f32 %v532, %v533
        %535 = vst [vmem:[%s190] sm:$0x1] %v534
        %s536 = sand.u32 %s115, 1
        %s537 = scalar_lea.sflag [#allocation3], %s536
        %s538 = sand.u32 %s115, 1
        %s539 = scalar_lea.vmem [#allocation2], %s538
        // Predicated region
        $region37: #{tpu_custom_call.1} parent=35 // pred_check
          %p540 = pneg %p125
        $region38: #{tpu_custom_call.1} parent=35 // pred_check_branch
          %542 = sbr.rel (%p540) target = $region40
        $region39: #{tpu_custom_call.1} parent=35 // pred_region
          %544 = vsyncadd %s537, 0
          %s545 = scalar_lea.hbm %s4, %s18
          %s547 = sshll.u32 %s539, 4
          %s548 = int_to_ptr.vmem [resolvable:$true] %s547
          %s549 = sshll.u32 %s545, 4
          %s550 = int_to_ptr.hbm [resolvable:$true] %s549
          %552 = dma.vmem_to_hbm [thread:$0]  %s548, 16, %s550, %s537
        $region40: #{tpu_custom_call.1} parent=35 // pred_fallthru
          _
      $region36: #{tpu_custom_call.1} parent=5 // pred_fallthru
        _
      %p553 = scmp.le.s32.totalorder 2, %s13
      // Predicated region
      $region41: #{tpu_custom_call.1} parent=5 // pred_check
        %p554 = pneg %p553
      $region42: #{tpu_custom_call.1} parent=5 // pred_check_branch
        %556 = sbr.rel (%p554) target = $region44
      $region43: #{tpu_custom_call.1} parent=5 // pred_region
        %s557 = ssub.s32 %s13, 2
        // Predicated region
        $region45: #{tpu_custom_call.1} parent=43 // pred_check
          %p558 = pneg %p131
        $region46: #{tpu_custom_call.1} parent=43 // pred_check_branch
          %560 = sbr.rel (%p558) target = $region48
        $region47: #{tpu_custom_call.1} parent=43 // pred_region
          %s561 = sand.u32 %s116, 1
          %s562 = scalar_lea.sflag [#allocation3], %s561
          %s563 = sand.u32 %s116, 1
          %s564 = scalar_lea.vmem [#allocation2], %s563
          %566 = dma.done %s562, 16
        $region48: #{tpu_custom_call.1} parent=43 // pred_fallthru
          _
      $region44: #{tpu_custom_call.1} parent=5 // pred_fallthru
        _
    $region6: #{tpu_custom_call.1} parent=1 // loop_footer
      %s17 = sadd.s32 1, %s13
    $region7: #{tpu_custom_call.1} parent=1 // loop_footer_branch
      %12 = sbr.rel target = $region3
    $region8: #{tpu_custom_call.1} parent=1 // loop_exit
      _
    %567 = vsyncpa [#allocation3], 1
    %s568 = scalar_lea.sflag [#allocation3], 1
    %569 = vsyncpa %s568, 1

</llo_original>
